<compile_context>
chip_gen: v5e
topology: v5e:2x2
jax: 0.10.0
libtpu: 0.0.40
codegen_flags: <defaults>
</compile_context>

<pallas_src>
from functools import partial

import numpy as np
import jax
import jax.numpy as jnp
from jax.experimental import pallas as pl
from jax.experimental.pallas import tpu as pltpu


MXU_DTYPE = jnp.bfloat16      # matmul operand dtype; jnp.float32 => exact f32 parity
STREAM_DTYPE = jnp.bfloat16   # adj / support HBM->VMEM streaming dtype


# ----------------------------------------------------------------------------- kernel

def _fused_sage_kernel(adj0_ref, adj1_ref, sup_ref, h0_ref, rows_ref, cols_ref,
                       w0_ref, w1_ref, rst_ref, loss_ref):
    """Fused AdaptSAGEConv x2 + variance-reduction loss.

    adj0:[n1,n0] adj1:[n2,n1] sup:[n2,n1]   (bf16 stream, 0/1 adj exact in bf16)
    h0:[n0,F] f32
    rows:[3,max(n0,n1)] f32 = [hu0 | hu1 | 1/q1]
    cols:[max(n0,n1,n2),6] f32 = [hv1 | nd1 | hv2 | nd2 | nd0/q0 | nd1/q1]
    w0:[F,HP] w1:[HP,OP] (MXU dtype)  ->  rst:[n2,OP] f32, loss:[1,1] f32
    """
    f32 = jnp.float32
    cd = w0_ref.dtype                                    # MXU operand dtype

    n1, n0 = adj0_ref.shape
    n2 = adj1_ref.shape[0]

    adj0 = adj0_ref[...].astype(f32)                     # upcast BEFORE edge-count sums
    adj1 = adj1_ref[...].astype(f32)
    sup = sup_ref[...].astype(f32)

    # ---- unpack consolidated small vectors (static slices of the two slabs)
    hu0 = rows_ref[0:1, :n0]                             # [1, n0]
    hu1 = rows_ref[1:2, :n1]                             # [1, n1]
    iq1 = rows_ref[2:3, :n1]                             # [1, n1]  exact 1/q1 (loss)
    hv1 = cols_ref[:n1, 0:1]                             # [n1, 1]
    nd1 = cols_ref[:n1, 1:2]                             # [n1, 1]
    hv2 = cols_ref[:n2, 2:3]                             # [n2, 1]
    nd2 = cols_ref[:n2, 3:4]                             # [n2, 1]
    s0 = cols_ref[:n0, 4:5]                              # [n0, 1]  nd0 / q0 (exact)
    s1 = cols_ref[:n1, 5:6]                              # [n1, 1]  nd1 / q1 (exact)

    # ---------------- layer 0:  h1 = relu( (nd1 * (M0 @ (c0 * h0))) @ W0 )
    ne0 = jnp.sum(adj0)                                  # edge count, in-kernel (resident block)
    inv_e0 = jnp.where(ne0 > 0.0, 1.0 / jnp.maximum(ne0, 1.0), 0.0)
    h0s = (h0_ref[...] * (s0 * inv_e0)).astype(cd)       # fold per-src scale into features
    M0 = (adj0 * (jnp.maximum(hu0 + hv1, 0.0) + 0.1)).astype(cd)              # [n1, n0]
    agg0 = jnp.dot(M0, h0s, preferred_element_type=f32) * nd1                 # [n1, F]
    h1 = jnp.maximum(
        jnp.dot(agg0.astype(cd), w0_ref[...], preferred_element_type=f32), 0.0)   # [n1, HP]

    # ---------------- layer 1 (project first: pre1 == pre_sup, reused by loss)
    pre1 = jnp.dot(h1.astype(cd), w1_ref[...], preferred_element_type=f32)    # [n1, OP]
    ne1 = jnp.sum(adj1)
    inv_e1 = jnp.where(ne1 > 0.0, 1.0 / jnp.maximum(ne1, 1.0), 0.0)
    r1 = jnp.maximum(hu1 + hv2, 0.0)                                          # [n2, n1] shared w/ loss
    M1 = (adj1 * (r1 + 0.1)).astype(cd)
    agg1 = jnp.dot(M1, (pre1 * (s1 * inv_e1)).astype(cd),
                   preferred_element_type=f32)                                # [n2, OP]
    rst = jnp.maximum(agg1 * nd2, 0.0)
    rst_ref[...] = rst

    # ---------------- variance-reduction loss.
    # NOTE: the +1.0 offset and the /n_src normalisation intentionally differ from
    # the forward path's +0.1 and /n_edges -- that matches the PyTorch reference.
    nf1, nf2 = float(n1), float(n2)
    att_l = (r1 + 1.0) * iq1 * (1.0 / nf1)                                    # [n2, n1]
    sm = jnp.sum(sup * att_l, axis=0, keepdims=True)                          # support_mean [1, n1]
    mu = jnp.sum(rst, axis=0, keepdims=True) * (1.0 / nf2)                    # mean over dst [1, OP]
    # sum_{u,o} (sm[u]*pre1[u,o] - mu[o])^2, expanded so sm stays lane-major
    # (no lane->sublane relayout).  Padded OP columns are exactly zero everywhere.
    t1 = jnp.sum(jnp.dot(sm * sm, pre1 * pre1, preferred_element_type=f32), keepdims=True)
    t2 = jnp.sum(mu * jnp.dot(sm, pre1, preferred_element_type=f32), keepdims=True)
    t3 = nf1 * jnp.sum(mu * mu, keepdims=True)
    loss_ref[...] = (t1 - 2.0 * t2 + t3) * (1.0 / (nf1 * nf2))


# ----------------------------------------------------------------------------- wrappers

_VMEM = pl.BlockSpec(memory_space=pltpu.MemorySpace.VMEM)


def _fused_call(adj0, adj1, support, h0, rows, cols, w0p, w1p):
    n1, n0 = adj0.shape
    n2 = adj1.shape[0]
    feat = h0.shape[1]
    hp, op = w0p.shape[1], w1p.shape[1]
    f32 = jnp.float32

    args = (adj0, adj1, support, h0, rows, cols, w0p, w1p)
    bytes_in = sum(int(a.size) * a.dtype.itemsize for a in args)
    bytes_out = n2 * op * 4 + 4
    flops = 2 * (n1 * n0 * feat + n1 * feat * hp + n1 * hp * op
                 + n2 * n1 * op + 2 * n1 * op)           # fwd matmuls + loss dots

    return pl.pallas_call(
        _fused_sage_kernel,
        out_shape=(jax.ShapeDtypeStruct((n2, op), f32),
                   jax.ShapeDtypeStruct((1, 1), f32)),
        in_specs=[_VMEM] * len(args),
        out_specs=(_VMEM, _VMEM),
        compiler_params=pltpu.CompilerParams(vmem_limit_bytes=32 << 20),
        cost_estimate=pl.CostEstimate(flops=int(flops), transcendentals=0,
                                      bytes_accessed=int(bytes_in + bytes_out)),
    )(*args)


@partial(jax.jit, static_argnames=("output_size",))
def _adapt_sage_forward(w0p, w1p, sample_weights, node_feature, norm_deg, norm_adj,
                        adj0, adj1, map0, map1, map2, q0, q1, h, *, output_size):
    # Per-layer node features / scalar projections (tiny XLA gathers + matvecs;
    # the data-dependent node gathers have no clean BlockSpec equivalent).
    x0, x1, x2 = node_feature[map0], node_feature[map1], node_feature[map2]
    hu0, hu1 = x0 @ sample_weights[:, 0], x1 @ sample_weights[:, 0]
    hv1, hv2 = x1 @ sample_weights[:, 1], x2 @ sample_weights[:, 1]
    nd0, nd1, nd2 = norm_deg[map0], norm_deg[map1], norm_deg[map2]
    support = norm_adj[map2][:, map1]                    # [n2, n1], no host-side .T

    n0, n1, n2 = map0.shape[0], map1.shape[0], map2.shape[0]
    n_row = max(n0, n1)
    n_col = max(n0, n1, n2)

    def pad_to(v, n):
        return jnp.pad(v, (0, n - v.shape[0]))

    # Consolidated small-vector slabs (exact f32 ratios pre-divided here).
    rows = jnp.stack([pad_to(hu0, n_row),
                      pad_to(hu1, n_row),
                      pad_to(1.0 / q1, n_row)], axis=0)                  # [3, n_row]
    cols = jnp.stack([pad_to(hv1, n_col), pad_to(nd1, n_col),
                      pad_to(hv2, n_col), pad_to(nd2, n_col),
                      pad_to(nd0 / q0, n_col), pad_to(nd1 / q1, n_col)], axis=1)  # [n_col, 6]

    rst_pad, loss = _fused_call(adj0.astype(STREAM_DTYPE), adj1.astype(STREAM_DTYPE),
                                support.astype(STREAM_DTYPE), h.astype(jnp.float32),
                                rows, cols, w0p, w1p)
    return rst_pad[:, :output_size], loss[0, 0]


# ----------------------------------------------------------------------------- glue

def _round_up(x, m):
    return (x + m - 1) // m * m


def normalize_adj_dense(adj):
    """Dense version of the scipy symmetric normalisation in the reference."""
    adj = np.eye(adj.shape[0], dtype=np.float64) + adj
    rowsum = adj.sum(1)
    with np.errstate(divide="ignore"):
        d_inv_sqrt = np.power(rowsum, -0.5)
    d_inv_sqrt[np.isinf(d_inv_sqrt)] = 0.0
    #  (adj @ D^-1/2).T @ D^-1/2
    return ((adj * d_inv_sqrt[None, :]).T * d_inv_sqrt[None, :]).astype(np.float32)


class AdaptGraphSAGENetPallas:
    """Two AdaptSAGEConv layers (input->hidden->output, bias=False, relu) + var loss."""

    def __init__(self, sample_weights, node_feature, hidden_size, output_size, key):
        input_size = node_feature.shape[1]
        gain = float(np.sqrt(2.0))                       # calculate_gain('relu')
        b0 = gain * np.sqrt(6.0 / (input_size + hidden_size))
        b1 = gain * np.sqrt(6.0 / (hidden_size + output_size))
        k0, k1 = jax.random.split(key)
        # nn.Linear weight is [out, in]; xavier_uniform_ with relu gain, bias=False.
        self.w0 = jax.random.uniform(k0, (hidden_size, input_size), jnp.float32, -b0, b0)
        self.w1 = jax.random.uniform(k1, (output_size, hidden_size), jnp.float32, -b1, b1)
        self.sample_weights = sample_weights
        self.node_feature = node_feature
        self.hidden_size = hidden_size
        self.output_size = output_size
        # Lane-dense padded + transposed weights for the kernel (zero cols/rows are
        # inert: relu(0)=0 and they contribute nothing to the loss).
        hp, op = _round_up(hidden_size, 128), _round_up(output_size, 128)
        w0p = jnp.zeros((input_size, hp), jnp.float32).at[:, :hidden_size].set(self.w0.T)
        w1p = jnp.zeros((hp, op), jnp.float32).at[:hidden_size, :output_size].set(self.w1.T)
        self.w0p = w0p.astype(MXU_DTYPE)
        self.w1p = w1p.astype(MXU_DTYPE)

    def forward(self, blocks, layer_mappings, q_probs, norm_deg, norm_adj, h,
                is_test=False):
        rst, loss = _adapt_sage_forward(
            self.w0p, self.w1p, self.sample_weights, self.node_feature, norm_deg,
            norm_adj, blocks[0], blocks[1],
            layer_mappings[0], layer_mappings[1], layer_mappings[2],
            q_probs[0], q_probs[1], h, output_size=self.output_size)
        if is_test:
            return rst
        return rst, loss


def _reference_forward(model, blocks, layer_mappings, q_probs, norm_deg, norm_adj, h):
    """Pure-JAX f32 re-implementation of the exact reference formula order (check only)."""
    sw, nf = model.sample_weights, model.node_feature
    x = [nf[m] for m in layer_mappings]
    hu = [xi @ sw[:, 0] for xi in x]
    hv = [xi @ sw[:, 1] for xi in x]
    nd = [norm_deg[m] for m in layer_mappings]

    def layer(adj, hidden, hu_s, hv_d, nd_s, nd_d, q, w):
        att = (nd_s[None, :] * nd_d[:, None]
               * (jax.nn.relu(hu_s[None, :] + hv_d[:, None]) + 0.1)
               / q[None, :] / jnp.sum(adj))
        return jax.nn.relu((adj * att) @ hidden @ w.T)

    h1 = layer(blocks[0], h, hu[0], hv[1], nd[0], nd[1], q_probs[0], model.w0)
    rst = layer(blocks[1], h1, hu[1], hv[2], nd[1], nd[2], q_probs[1], model.w1)
    support = norm_adj[layer_mappings[2]][:, layer_mappings[1]]
    n1, n2 = blocks[1].shape[1], blocks[1].shape[0]
    att = (jax.nn.relu(hu[1][None, :] + hv[2][:, None]) + 1.0) / q_probs[1][None, :] / n1
    sm = (support * att).sum(0)
    pre_sup = h1 @ model.w1.T
    mu = rst.mean(0)
    diff = sm[:, None] * pre_sup - mu[None, :]
    loss = jnp.sum(diff * diff) / n1 / n2
    return rst, loss


# ----------------------------------------------------------------------------- main

if __name__ == "__main__":
    key = jax.random.PRNGKey(0)
    N, F, HID, OUT = 128, 32, 32, 8           # nodes, input_size, hidden_size, num_labels
    n0, n1, n2 = 64, 32, 16                   # sampled nodes per layer (layer0/1/2)
    keys = jax.random.split(key, 8)

    # synthetic symmetric training graph (stands in for trainG / cora adjacency)
    g = (jax.random.uniform(keys[0], (N, N)) < 0.15).astype(jnp.float32)
    g = jnp.maximum(g, g.T) * (1.0 - jnp.eye(N, dtype=jnp.float32))
    in_deg = jnp.sum(g, axis=0)
    norm_deg = 1.0 / jnp.sqrt(in_deg + 1.0)                          # 1/sqrt(in_deg+1)
    norm_adj = jnp.asarray(normalize_adj_dense(np.asarray(g, dtype=np.float64)))

    node_feature = jax.random.normal(keys[1], (N, F), jnp.float32)
    sample_weights = 0.1 * jax.random.normal(keys[2], (F, 2), jnp.float32)

    # nested layer mappings, like neighbor sampling: layer2 ⊂ layer1 ⊂ layer0
    perm = jax.random.permutation(keys[3], N)
    map0, map1, map2 = perm[:n0], perm[:n1], perm[:n2]
    blocks = [g[map1][:, map0], g[map2][:, map1]]                    # [n_dst, n_src] blocks

    # block_aux_data: per-src-node sampling probabilities q_probs (strictly positive)
    q_probs = [jax.random.uniform(keys[4], (n0,), jnp.float32, 0.1, 1.0),
               jax.random.uniform(keys[5], (n1,), jnp.float32, 0.1, 1.0)]

    # initial hidden features = raw node features of layer-0 nodes
    h = node_feature[map0]

    model = AdaptGraphSAGENetPallas(sample_weights, node_feature, HID, OUT, keys[6])
    # TODO(synk): DGL NodeFlow / scipy-sparse graph plumbing has no Pallas equivalent;
    # blocks are materialised as dense [n_dst, n_src] adjacencies (numerically identical).
    rst, loss = model.forward(blocks, [map0, map1, map2], q_probs, norm_deg, norm_adj, h)
    jax.block_until_ready((rst, loss))
    assert rst.shape == (n2, OUT) and loss.shape == ()

    # sanity check vs a pure-JAX f32 reference (tolerance covers bf16 MXU operands
    # and the bf16 adj/support stream; reciprocals are now exact).
    rst_ref, loss_ref = _reference_forward(model, blocks, [map0, map1, map2],
                                           q_probs, norm_deg, norm_adj, h)
    rerr = float(jnp.max(jnp.abs(rst - rst_ref)) / (jnp.max(jnp.abs(rst_ref)) + 1e-12))
    lerr = float(jnp.abs(loss - loss_ref) / (jnp.abs(loss_ref) + 1e-12))
    assert np.isfinite(float(loss)) and rerr < 0.12 and lerr < 0.2, (rerr, lerr)
    print("KERNEL_OK")
</pallas_src>

<mosaic_0001>
module attributes {stable_mosaic.version = 11 : i64} {
  func.func @_fused_sage_kernel(%arg0: memref<32x64xbf16, #tpu.memory_space<vmem>>, %arg1: memref<16x32xbf16, #tpu.memory_space<vmem>>, %arg2: memref<16x32xbf16, #tpu.memory_space<vmem>>, %arg3: memref<64x32xf32, #tpu.memory_space<vmem>>, %arg4: memref<3x64xf32, #tpu.memory_space<vmem>>, %arg5: memref<64x6xf32, #tpu.memory_space<vmem>>, %arg6: memref<32x128xbf16, #tpu.memory_space<vmem>>, %arg7: memref<128x128xbf16, #tpu.memory_space<vmem>>, %arg8: memref<16x128xf32, #tpu.memory_space<vmem>>, %arg9: memref<1x1xf32, #tpu.memory_space<vmem>>) attributes {dimension_semantics = [], scalar_prefetch = 0 : i64, scratch_operands = 0 : i64, tpu.core_type = #tpu.core_type<tc>} {
    %c0 = arith.constant 0 : index
    %c0_0 = arith.constant 0 : index
    %0 = vector.load %arg0[%c0, %c0_0] : memref<32x64xbf16, #tpu.memory_space<vmem>>, vector<32x64xbf16>
    %1 = arith.extf %0 : vector<32x64xbf16> to vector<32x64xf32>
    %c0_1 = arith.constant 0 : index
    %c0_2 = arith.constant 0 : index
    %2 = vector.load %arg1[%c0_1, %c0_2] : memref<16x32xbf16, #tpu.memory_space<vmem>>, vector<16x32xbf16>
    %3 = arith.extf %2 : vector<16x32xbf16> to vector<16x32xf32>
    %c0_3 = arith.constant 0 : index
    %c0_4 = arith.constant 0 : index
    %4 = vector.load %arg2[%c0_3, %c0_4] : memref<16x32xbf16, #tpu.memory_space<vmem>>, vector<16x32xbf16>
    %5 = arith.extf %4 : vector<16x32xbf16> to vector<16x32xf32>
    %c0_5 = arith.constant 0 : index
    %c0_6 = arith.constant 0 : index
    %6 = vector.load %arg4[%c0_5, %c0_6] : memref<3x64xf32, #tpu.memory_space<vmem>>, vector<1x64xf32>
    %c1 = arith.constant 1 : index
    %c0_7 = arith.constant 0 : index
    %7 = vector.load %arg4[%c1, %c0_7] : memref<3x64xf32, #tpu.memory_space<vmem>>, vector<1x32xf32>
    %c2 = arith.constant 2 : index
    %c0_8 = arith.constant 0 : index
    %8 = vector.load %arg4[%c2, %c0_8] : memref<3x64xf32, #tpu.memory_space<vmem>>, vector<1x32xf32>
    %c0_9 = arith.constant 0 : index
    %c0_10 = arith.constant 0 : index
    %9 = vector.load %arg5[%c0_9, %c0_10] : memref<64x6xf32, #tpu.memory_space<vmem>>, vector<32x1xf32>
    %c0_11 = arith.constant 0 : index
    %c1_12 = arith.constant 1 : index
    %10 = vector.load %arg5[%c0_11, %c1_12] : memref<64x6xf32, #tpu.memory_space<vmem>>, vector<32x1xf32>
    %c0_13 = arith.constant 0 : index
    %c2_14 = arith.constant 2 : index
    %11 = vector.load %arg5[%c0_13, %c2_14] : memref<64x6xf32, #tpu.memory_space<vmem>>, vector<16x1xf32>
    %c0_15 = arith.constant 0 : index
    %c3 = arith.constant 3 : index
    %12 = vector.load %arg5[%c0_15, %c3] : memref<64x6xf32, #tpu.memory_space<vmem>>, vector<16x1xf32>
    %c0_16 = arith.constant 0 : index
    %c4 = arith.constant 4 : index
    %13 = vector.load %arg5[%c0_16, %c4] : memref<64x6xf32, #tpu.memory_space<vmem>>, vector<64x1xf32>
    %c0_17 = arith.constant 0 : index
    %c5 = arith.constant 5 : index
    %14 = vector.load %arg5[%c0_17, %c5] : memref<64x6xf32, #tpu.memory_space<vmem>>, vector<32x1xf32>
    %15 = vector.shape_cast %1 : vector<32x64xf32> to vector<1x32x64xf32>
    %cst = arith.constant dense<0.000000e+00> : vector<1xf32>
    %16 = vector.multi_reduction <add>, %15, %cst [1, 2] : vector<1x32x64xf32> to vector<1xf32>
    %17 = vector.shape_cast %16 : vector<1xf32> to vector<1x1x1xf32>
    %18 = vector.extract %17[0, 0, 0] : f32 from vector<1x1x1xf32>
    %cst_18 = arith.constant 0.000000e+00 : f32
    %19 = arith.cmpf ogt, %18, %cst_18 : f32
    %cst_19 = arith.constant 1.000000e+00 : f32
    %20 = arith.maximumf %18, %cst_19 : f32
    %cst_20 = arith.constant 1.000000e+00 : f32
    %21 = arith.divf %cst_20, %20 : f32
    %cst_21 = arith.constant 0.000000e+00 : f32
    %22 = arith.select %19, %21, %cst_21 : f32
    %c0_22 = arith.constant 0 : index
    %c0_23 = arith.constant 0 : index
    %23 = vector.load %arg3[%c0_22, %c0_23] : memref<64x32xf32, #tpu.memory_space<vmem>>, vector<64x32xf32>
    %24 = vector.broadcast %22 : f32 to vector<64x1xf32>
    %25 = arith.mulf %13, %24 : vector<64x1xf32>
    %26 = vector.broadcast %25 : vector<64x1xf32> to vector<64x32xf32>
    %27 = arith.mulf %23, %26 : vector<64x32xf32>
    %28 = arith.truncf %27 : vector<64x32xf32> to vector<64x32xbf16>
    %29 = vector.broadcast %6 : vector<1x64xf32> to vector<32x64xf32>
    %30 = vector.broadcast %9 : vector<32x1xf32> to vector<32x64xf32>
    %31 = arith.addf %29, %30 : vector<32x64xf32>
    %cst_24 = arith.constant 0.000000e+00 : f32
    %32 = vector.broadcast %cst_24 : f32 to vector<32x64xf32>
    %33 = arith.maximumf %31, %32 : vector<32x64xf32>
    %cst_25 = arith.constant 1.000000e-01 : f32
    %34 = vector.broadcast %cst_25 : f32 to vector<32x64xf32>
    %35 = arith.addf %33, %34 : vector<32x64xf32>
    %36 = arith.mulf %1, %35 : vector<32x64xf32>
    %37 = arith.truncf %36 : vector<32x64xf32> to vector<32x64xbf16>
    %cst_26 = arith.constant dense<0.000000e+00> : vector<32x32xf32>
    %38 = tpu.matmul %37, %28, %cst_26 {dimension_numbers = #tpu.dot_dimension_numbers<[1], [0], [0], [1], [0, 0, 1, 1], [], []>} : vector<32x64xbf16>, vector<64x32xbf16>, vector<32x32xf32> -> vector<32x32xf32>
    %39 = vector.broadcast %10 : vector<32x1xf32> to vector<32x32xf32>
    %40 = arith.mulf %38, %39 : vector<32x32xf32>
    %41 = arith.truncf %40 : vector<32x32xf32> to vector<32x32xbf16>
    %c0_27 = arith.constant 0 : index
    %c0_28 = arith.constant 0 : index
    %42 = vector.load %arg6[%c0_27, %c0_28] : memref<32x128xbf16, #tpu.memory_space<vmem>>, vector<32x128xbf16>
    %cst_29 = arith.constant dense<0.000000e+00> : vector<32x128xf32>
    %43 = tpu.matmul %41, %42, %cst_29 {dimension_numbers = #tpu.dot_dimension_numbers<[1], [0], [0], [1], [0, 0, 1, 1], [], []>} : vector<32x32xbf16>, vector<32x128xbf16>, vector<32x128xf32> -> vector<32x128xf32>
    %cst_30 = arith.constant 0.000000e+00 : f32
    %44 = vector.broadcast %cst_30 : f32 to vector<32x128xf32>
    %45 = arith.maximumf %43, %44 : vector<32x128xf32>
    %46 = arith.truncf %45 : vector<32x128xf32> to vector<32x128xbf16>
    %c0_31 = arith.constant 0 : index
    %c0_32 = arith.constant 0 : index
    %47 = vector.load %arg7[%c0_31, %c0_32] : memref<128x128xbf16, #tpu.memory_space<vmem>>, vector<128x128xbf16>
    %cst_33 = arith.constant dense<0.000000e+00> : vector<32x128xf32>
    %48 = tpu.matmul %46, %47, %cst_33 {dimension_numbers = #tpu.dot_dimension_numbers<[1], [0], [0], [1], [0, 0, 1, 1], [], []>} : vector<32x128xbf16>, vector<128x128xbf16>, vector<32x128xf32> -> vector<32x128xf32>
    %49 = vector.shape_cast %3 : vector<16x32xf32> to vector<1x16x32xf32>
    %cst_34 = arith.constant dense<0.000000e+00> : vector<1xf32>
    %50 = vector.multi_reduction <add>, %49, %cst_34 [1, 2] : vector<1x16x32xf32> to vector<1xf32>
    %51 = vector.shape_cast %50 : vector<1xf32> to vector<1x1x1xf32>
    %52 = vector.extract %51[0, 0, 0] : f32 from vector<1x1x1xf32>
    %cst_35 = arith.constant 0.000000e+00 : f32
    %53 = arith.cmpf ogt, %52, %cst_35 : f32
    %cst_36 = arith.constant 1.000000e+00 : f32
    %54 = arith.maximumf %52, %cst_36 : f32
    %cst_37 = arith.constant 1.000000e+00 : f32
    %55 = arith.divf %cst_37, %54 : f32
    %cst_38 = arith.constant 0.000000e+00 : f32
    %56 = arith.select %53, %55, %cst_38 : f32
    %57 = vector.broadcast %7 : vector<1x32xf32> to vector<16x32xf32>
    %58 = vector.broadcast %11 : vector<16x1xf32> to vector<16x32xf32>
    %59 = arith.addf %57, %58 : vector<16x32xf32>
    %cst_39 = arith.constant 0.000000e+00 : f32
    %60 = vector.broadcast %cst_39 : f32 to vector<16x32xf32>
    %61 = arith.maximumf %59, %60 : vector<16x32xf32>
    %cst_40 = arith.constant 1.000000e-01 : f32
    %62 = vector.broadcast %cst_40 : f32 to vector<16x32xf32>
    %63 = arith.addf %61, %62 : vector<16x32xf32>
    %64 = arith.mulf %3, %63 : vector<16x32xf32>
    %65 = arith.truncf %64 : vector<16x32xf32> to vector<16x32xbf16>
    %66 = vector.broadcast %56 : f32 to vector<32x1xf32>
    %67 = arith.mulf %14, %66 : vector<32x1xf32>
    %68 = vector.broadcast %67 : vector<32x1xf32> to vector<32x128xf32>
    %69 = arith.mulf %48, %68 : vector<32x128xf32>
    %70 = arith.truncf %69 : vector<32x128xf32> to vector<32x128xbf16>
    %cst_41 = arith.constant dense<0.000000e+00> : vector<16x128xf32>
    %71 = tpu.matmul %65, %70, %cst_41 {dimension_numbers = #tpu.dot_dimension_numbers<[1], [0], [0], [1], [0, 0, 1, 1], [], []>} : vector<16x32xbf16>, vector<32x128xbf16>, vector<16x128xf32> -> vector<16x128xf32>
    %72 = vector.broadcast %12 : vector<16x1xf32> to vector<16x128xf32>
    %73 = arith.mulf %71, %72 : vector<16x128xf32>
    %cst_42 = arith.constant 0.000000e+00 : f32
    %74 = vector.broadcast %cst_42 : f32 to vector<16x128xf32>
    %75 = arith.maximumf %73, %74 : vector<16x128xf32>
    %c0_43 = arith.constant 0 : index
    %c0_44 = arith.constant 0 : index
    %76 = vector.load %arg8[%c0_43, %c0_44] : memref<16x128xf32, #tpu.memory_space<vmem>>, vector<16x128xf32>
    tpu.vector_store %arg8[%c0_43, %c0_44], %75 {strides = array<i32>} : memref<16x128xf32, #tpu.memory_space<vmem>>, vector<16x128xf32>,
    %cst_45 = arith.constant 1.000000e+00 : f32
    %77 = vector.broadcast %cst_45 : f32 to vector<16x32xf32>
    %78 = arith.addf %61, %77 : vector<16x32xf32>
    %79 = vector.broadcast %8 : vector<1x32xf32> to vector<16x32xf32>
    %80 = arith.mulf %78, %79 : vector<16x32xf32>
    %cst_46 = arith.constant 3.125000e-02 : f32
    %81 = vector.broadcast %cst_46 : f32 to vector<16x32xf32>
    %82 = arith.mulf %80, %81 : vector<16x32xf32>
    %83 = arith.mulf %5, %82 : vector<16x32xf32>
    %cst_47 = arith.constant dense<0.000000e+00> : vector<32xf32>
    %84 = vector.multi_reduction <add>, %83, %cst_47 [0] : vector<16x32xf32> to vector<32xf32>
    %85 = vector.shape_cast %84 : vector<32xf32> to vector<1x32xf32>
    %cst_48 = arith.constant dense<0.000000e+00> : vector<128xf32>
    %86 = vector.multi_reduction <add>, %75, %cst_48 [0] : vector<16x128xf32> to vector<128xf32>
    %87 = vector.shape_cast %86 : vector<128xf32> to vector<1x128xf32>
    %cst_49 = arith.constant 6.250000e-02 : f32
    %88 = vector.broadcast %cst_49 : f32 to vector<1x128xf32>
    %89 = arith.mulf %87, %88 : vector<1x128xf32>
    %90 = arith.mulf %85, %85 : vector<1x32xf32>
    %91 = arith.mulf %48, %48 : vector<32x128xf32>
    %cst_50 = arith.constant dense<0.000000e+00> : vector<1x128xf32>
    %92 = tpu.matmul %90, %91, %cst_50 {dimension_numbers = #tpu.dot_dimension_numbers<[1], [0], [0], [1], [0, 0, 1, 1], [], []>} : vector<1x32xf32>, vector<32x128xf32>, vector<1x128xf32> -> vector<1x128xf32>
    %93 = vector.shape_cast %92 : vector<1x128xf32> to vector<1x1x128xf32>
    %cst_51 = arith.constant dense<0.000000e+00> : vector<1xf32>
    %94 = vector.multi_reduction <add>, %93, %cst_51 [1, 2] : vector<1x1x128xf32> to vector<1xf32>
    %95 = vector.shape_cast %94 : vector<1xf32> to vector<1x1x1xf32>
    %96 = vector.extract %95[0, 0, 0] : f32 from vector<1x1x1xf32>
    %97 = vector.broadcast %96 : f32 to vector<1x1xf32>
    %cst_52 = arith.constant dense<0.000000e+00> : vector<1x128xf32>
    %98 = tpu.matmul %85, %48, %cst_52 {dimension_numbers = #tpu.dot_dimension_numbers<[1], [0], [0], [1], [0, 0, 1, 1], [], []>} : vector<1x32xf32>, vector<32x128xf32>, vector<1x128xf32> -> vector<1x128xf32>
    %99 = arith.mulf %89, %98 : vector<1x128xf32>
    %100 = vector.shape_cast %99 : vector<1x128xf32> to vector<1x1x128xf32>
    %cst_53 = arith.constant dense<0.000000e+00> : vector<1xf32>
    %101 = vector.multi_reduction <add>, %100, %cst_53 [1, 2] : vector<1x1x128xf32> to vector<1xf32>
    %102 = vector.shape_cast %101 : vector<1xf32> to vector<1x1x1xf32>
    %103 = vector.extract %102[0, 0, 0] : f32 from vector<1x1x1xf32>
    %104 = vector.broadcast %103 : f32 to vector<1x1xf32>
    %105 = arith.mulf %89, %89 : vector<1x128xf32>
    %106 = vector.shape_cast %105 : vector<1x128xf32> to vector<1x1x128xf32>
    %cst_54 = arith.constant dense<0.000000e+00> : vector<1xf32>
    %107 = vector.multi_reduction <add>, %106, %cst_54 [1, 2] : vector<1x1x128xf32> to vector<1xf32>
    %108 = vector.shape_cast %107 : vector<1xf32> to vector<1x1x1xf32>
    %109 = vector.extract %108[0, 0, 0] : f32 from vector<1x1x1xf32>
    %110 = vector.broadcast %109 : f32 to vector<1x1xf32>
    %cst_55 = arith.constant 3.200000e+01 : f32
    %111 = vector.broadcast %cst_55 : f32 to vector<1x1xf32>
    %112 = arith.mulf %111, %110 : vector<1x1xf32>
    %cst_56 = arith.constant 2.000000e+00 : f32
    %113 = vector.broadcast %cst_56 : f32 to vector<1x1xf32>
    %114 = arith.mulf %113, %104 : vector<1x1xf32>
    %115 = arith.subf %97, %114 : vector<1x1xf32>
    %116 = arith.addf %115, %112 : vector<1x1xf32>
    %cst_57 = arith.constant 0.001953125 : f32
    %117 = vector.broadcast %cst_57 : f32 to vector<1x1xf32>
    %118 = arith.mulf %116, %117 : vector<1x1xf32>
    %c0_58 = arith.constant 0 : index
    %c0_59 = arith.constant 0 : index
    %119 = vector.load %arg9[%c0_58, %c0_59] : memref<1x1xf32, #tpu.memory_space<vmem>>, vector<1x1xf32>
    tpu.vector_store %arg9[%c0_58, %c0_59], %118 {strides = array<i32>} : memref<1x1xf32, #tpu.memory_space<vmem>>, vector<1x1xf32>,
    return
  }
}

</mosaic_0001>

<llo_original>
// kernel: _adapt_sage_forward.1
$region0: #{_adapt_sage_forward.1}
  #allocation0 [shape = 'u32[]', space=smem, size = 0x4, offset = 0x4, fixed_abs, tag = 'smem constant byte address 0x4 - core index']
  #allocation1 [shape = 'u32[72,128]{1,0:T(1,128)}', space=vmem, size = 0x9000, scoped, tag = 'internal scratch']
  %s0 = inlined_call_operand.vmem [shape: bf16[32,64], index: 0, kind: input, shape index: {}]
  %s1 = inlined_call_operand.vmem [shape: bf16[16,32], index: 1, kind: input, shape index: {}]
  %s2 = inlined_call_operand.vmem [shape: bf16[16,32], index: 2, kind: input, shape index: {}]
  %s3 = inlined_call_operand.vmem [shape: f32[64,32], index: 3, kind: input, shape index: {}]
  %s4 = inlined_call_operand.vmem [shape: f32[3,64], index: 4, kind: input, shape index: {}]
  %s5 = inlined_call_operand.vmem [shape: f32[64,6], index: 5, kind: input, shape index: {}]
  %s6 = inlined_call_operand.vmem [shape: bf16[32,128], index: 6, kind: input, shape index: {}]
  %s7 = inlined_call_operand.vmem [shape: bf16[128,128], index: 7, kind: input, shape index: {}]
  %s8 = inlined_call_operand.vmem [shape: f32[16,128], index: 8, kind: output, shape index: {0}]
  %s9 = inlined_call_operand.hbm [shape: f32[1,1], index: 9, kind: output, shape index: {1}]
  %10 = xla_tuple %s8, %s9
  %s11 = sld [smem:[#allocation0]]
  $region50: #{_adapt_sage_forward.1} parent=0
    _
  %s13 = ssub.s32 1, %s11
  %s14 = scalar_select 0, %s13, %s11
  $region1: #{_adapt_sage_forward.1} parent=0
    #allocation2 [shape = 'u8[512]{0}', space=vmem, size = 0x400, scoped, tag = 'output window, operand 1, single buffered']
    #allocation3 [shape = 's32[1]{0}', space=sflag, size = 0x4, scoped, tag = 'scoped memory for _adapt_sage_forward.1']
    %15 = vsyncpa [#allocation3], 0
    // Predicated region
    $region2: #{_adapt_sage_forward.1} parent=1 // pred_check
      _
    $region3: #{_adapt_sage_forward.1} parent=1 // pred_check_branch
      %17 = sbr.rel (0) target = $region5
    $region4: #{_adapt_sage_forward.1} parent=1 // pred_region
      _
    $region5: #{_adapt_sage_forward.1} parent=1 // pred_fallthru
      _
    // Predicated region
    $region6: #{_adapt_sage_forward.1} parent=1 // pred_check
      _
    $region7: #{_adapt_sage_forward.1} parent=1 // pred_check_branch
      %19 = sbr.rel (0) target = $region9
    $region8: #{_adapt_sage_forward.1} parent=1 // pred_region
      _
    $region9: #{_adapt_sage_forward.1} parent=1 // pred_fallthru
      _
    // Predicated region
    $region10: #{_adapt_sage_forward.1} parent=1 // pred_check
      _
    $region11: #{_adapt_sage_forward.1} parent=1 // pred_check_branch
      %21 = sbr.rel (0) target = $region13
    $region12: #{_adapt_sage_forward.1} parent=1 // pred_region
      _
    $region13: #{_adapt_sage_forward.1} parent=1 // pred_fallthru
      _
    // Predicated region
    $region14: #{_adapt_sage_forward.1} parent=1 // pred_check
      _
    $region15: #{_adapt_sage_forward.1} parent=1 // pred_check_branch
      %23 = sbr.rel (0) target = $region17
    $region16: #{_adapt_sage_forward.1} parent=1 // pred_region
      _
    $region17: #{_adapt_sage_forward.1} parent=1 // pred_fallthru
      _
    // Predicated region
    $region18: #{_adapt_sage_forward.1} parent=1 // pred_check
      _
    $region19: #{_adapt_sage_forward.1} parent=1 // pred_check_branch
      %25 = sbr.rel (0) target = $region21
    $region20: #{_adapt_sage_forward.1} parent=1 // pred_region
      _
    $region21: #{_adapt_sage_forward.1} parent=1 // pred_fallthru
      _
    // Predicated region
    $region22: #{_adapt_sage_forward.1} parent=1 // pred_check
      _
    $region23: #{_adapt_sage_forward.1} parent=1 // pred_check_branch
      %27 = sbr.rel (0) target = $region25
    $region24: #{_adapt_sage_forward.1} parent=1 // pred_region
      _
    $region25: #{_adapt_sage_forward.1} parent=1 // pred_fallthru
      _
    // Predicated region
    $region26: #{_adapt_sage_forward.1} parent=1 // pred_check
      _
    $region27: #{_adapt_sage_forward.1} parent=1 // pred_check_branch
      %29 = sbr.rel (0) target = $region29
    $region28: #{_adapt_sage_forward.1} parent=1 // pred_region
      _
    $region29: #{_adapt_sage_forward.1} parent=1 // pred_fallthru
      _
    // Predicated region
    $region30: #{_adapt_sage_forward.1} parent=1 // pred_check
      _
    $region31: #{_adapt_sage_forward.1} parent=1 // pred_check_branch
      %31 = sbr.rel (0) target = $region33
    $region32: #{_adapt_sage_forward.1} parent=1 // pred_region
      _
    $region33: #{_adapt_sage_forward.1} parent=1 // pred_fallthru
      _
    %v33 = vld [vmem:[%s0] sm:$0xf]
    %v34 = vld [vmem:[%s0 + $0x4] sm:$0xf]
    %v35 = vld [vmem:[%s0 + $0x8] sm:$0xf]
    %v36 = vld [vmem:[%s0 + $0xc] sm:$0xf]
    %v37 = vunpack.c.l.bf16 %v33
    %v38 = vunpack.c.l.bf16 %v34
    %v39 = vunpack.c.l.bf16 %v35
    %v40 = vunpack.c.l.bf16 %v36
    %v41 = vld [vmem:[%s1] sm:$0xf]
    %v42 = vld [vmem:[%s1 + $0x4] sm:$0xf]
    %v43 = vunpack.c.l.bf16 %v41
    %v44 = vunpack.c.l.bf16 %v42
    %v45 = vld [vmem:[%s2] sm:$0xf]
    %v46 = vld [vmem:[%s2 + $0x4] sm:$0xf]
    %v47 = vunpack.c.l.bf16 %v45
    %v48 = vunpack.c.l.bf16 %v46
    %v49 = vld [vmem:[%s4] sm:$0x1]
    %v50 = vld [vmem:[%s4 + $0x1] sm:$0x1]
    %v51 = vld [vmem:[%s4 + $0x2] sm:$0x1]
    %v52 = vld [vmem:[%s5] sm:$0xff]
    %v53 = vld [vmem:[%s5 + $0x8] sm:$0xff]
    %v54 = vld [vmem:[%s5 + $0x10] sm:$0xff]
    %v55 = vld [vmem:[%s5 + $0x18] sm:$0xff]
    %v56 = vld [vmem:[%s5 + $0x20] sm:$0xff]
    %v57 = vld [vmem:[%s5 + $0x28] sm:$0xff]
    %v58 = vld [vmem:[%s5 + $0x30] sm:$0xff]
    %v59 = vld [vmem:[%s5 + $0x38] sm:$0xff]
    %vm60 = vcmask 523264
    %v61 = vsel %vm60, %v37, 0.0
    %v62 = vsel %vm60, %v38, 0.0
    %v63 = vadd.f32 %v61, %v62
    %v64 = vsel %vm60, %v39, 0.0
    %v65 = vadd.f32 %v63, %v64
    %v66 = vsel %vm60, %v40, 0.0
    %v67 = vadd.f32 %v65, %v66
    %68 = vadd.xlane.f32.xlu0 %v67
    %v69 = vpop.xlane.xlu0 %68
    %v70 = vrot.slane %v69, 4
    %v71 = vadd.f32 %v69, %v70
    %v72 = vrot.slane %v71, 2
    %v73 = vadd.f32 %v71, %v72
    %v74 = vrot.slane %v73, 1
    %v75 = vadd.f32 %v73, %v74
    %s76 = vtos %v75
    %p77 = scmp.gt.f32.partialorder %s76, 0.0
    %s78 = smax.f32 %s76, 1.0
    %v79 = vstv %s78
    %v80 = vrcp.pop %v79
    %v81 = vmul.f32 %v79, %v80
    %v82 = vsub.f32 1.0, %v81
    %v83 = vmul.f32 %v80, %v82
    %v84 = vadd.f32 %v80, %v83
    %vm85 = vweird.f32 %v79
    %vm86 = vweird.f32 %v80
    %vm87 = vmor %vm85, %vm86
    %v88 = vsel %vm87, %v80, %v84
    %v89 = vand.u32 2147483647, %v79
    %vm90 = vcmp.eq.f32.partialorder %v89, 8.507059e+37
    %v91 = vand.u32 %v79, 2147483648
    %v92 = vor.u32 1.1754944e-38, %v91
    %v93 = vsel %vm90, %v92, %v88
    %s94 = vtos %v93
    %s95 = scalar_select %p77, %s94, 0.0
    %v96 = vld [vmem:[%s3] sm:$0xff]
    %v97 = vld [vmem:[%s3 + $0x8] sm:$0xff]
    %v98 = vld [vmem:[%s3 + $0x10] sm:$0xff]
    %v99 = vld [vmem:[%s3 + $0x18] sm:$0xff]
    %v100 = vld [vmem:[%s3 + $0x20] sm:$0xff]
    %v101 = vld [vmem:[%s3 + $0x28] sm:$0xff]
    %v102 = vld [vmem:[%s3 + $0x30] sm:$0xff]
    %v103 = vld [vmem:[%s3 + $0x38] sm:$0xff]
    %v104 = vstv %s95
    %v105 = vmul.f32 %v52, %v104
    %v106 = vmul.f32 %v53, %v104
    %v107 = vmul.f32 %v54, %v104
    %v108 = vmul.f32 %v55, %v104
    %v109 = vmul.f32 %v56, %v104
    %v110 = vmul.f32 %v57, %v104
    %v111 = vmul.f32 %v58, %v104
    %v112 = vmul.f32 %v59, %v104
    %114 = vset.pattern.permute.xlu0 4
    %115 = vperm.xlu0 %114, %v105
    %v116 = vpop.permute.xlu0 %115
    %119 = vset.pattern.permute.xlu0 4
    %120 = vperm.xlu0 %119, %v106
    %v121 = vpop.permute.xlu0 %120
    %124 = vset.pattern.permute.xlu0 4
    %125 = vperm.xlu0 %124, %v107
    %v126 = vpop.permute.xlu0 %125
    %129 = vset.pattern.permute.xlu0 4
    %130 = vperm.xlu0 %129, %v108
    %v131 = vpop.permute.xlu0 %130
    %134 = vset.pattern.permute.xlu0 4
    %135 = vperm.xlu0 %134, %v109
    %v136 = vpop.permute.xlu0 %135
    %139 = vset.pattern.permute.xlu0 4
    %140 = vperm.xlu0 %139, %v110
    %v141 = vpop.permute.xlu0 %140
    %144 = vset.pattern.permute.xlu0 4
    %145 = vperm.xlu0 %144, %v111
    %v146 = vpop.permute.xlu0 %145
    %149 = vset.pattern.permute.xlu0 4
    %150 = vperm.xlu0 %149, %v112
    %v151 = vpop.permute.xlu0 %150
    %v153 = vmul.f32 %v96, %v116
    %v154 = vmul.f32 %v97, %v121
    %v155 = vmul.f32 %v98, %v126
    %v156 = vmul.f32 %v99, %v131
    %v157 = vmul.f32 %v100, %v136
    %v158 = vmul.f32 %v101, %v141
    %v159 = vmul.f32 %v102, %v146
    %v160 = vmul.f32 %v103, %v151
    %v161 = vpack.c.bf16 %v154, %v153
    %v162 = vpack.c.bf16 %v156, %v155
    %v163 = vpack.c.bf16 %v158, %v157
    %v164 = vpack.c.bf16 %v160, %v159
    %v165 = vperm.slane %v49, 0
    %167 = vset.pattern.permute.xlu0 0
    %168 = vperm.xlu0 %167, %v52
    %v169 = vpop.permute.xlu0 %168
    %172 = vset.pattern.permute.xlu0 0
    %173 = vperm.xlu0 %172, %v53
    %v174 = vpop.permute.xlu0 %173
    %177 = vset.pattern.permute.xlu0 0
    %178 = vperm.xlu0 %177, %v54
    %v179 = vpop.permute.xlu0 %178
    %182 = vset.pattern.permute.xlu0 0
    %183 = vperm.xlu0 %182, %v55
    %v184 = vpop.permute.xlu0 %183
    %v186 = vadd.f32 %v165, %v169
    %v187 = vadd.f32 %v165, %v174
    %v188 = vadd.f32 %v165, %v179
    %v189 = vadd.f32 %v165, %v184
    %v190 = vmax.f32 %v186, 0.0
    %v191 = vmax.f32 %v187, 0.0
    %v192 = vmax.f32 %v188, 0.0
    %v193 = vmax.f32 %v189, 0.0
    %v194 = vadd.f32 %v190, 0.1
    %v195 = vadd.f32 %v191, 0.1
    %v196 = vadd.f32 %v192, 0.1
    %v197 = vadd.f32 %v193, 0.1
    %v198 = vmul.f32 %v37, %v194
    %v199 = vmul.f32 %v38, %v195
    %v200 = vmul.f32 %v39, %v196
    %v201 = vmul.f32 %v40, %v197
    %v202 = vpack.c.bf16 %v199, %v198
    %v203 = vpack.c.bf16 %v201, %v200
    %v205 = vsel %vm60, %v202, 0
    %v208 = vsel %vm60, %v203, 0
    %210 = vmatpush.bf16.msra.mxu0 0
    %211 = vmatpush.bf16.msra.mxu0 0
    %212 = vmatpush.bf16.msra.mxu0 0
    %213 = vmatpush.bf16.msra.mxu0 0
    %214 = vmatpush.bf16.msra.mxu0 %v164
    %215 = vmatpush.bf16.msra.mxu0 %v163
    %216 = vmatpush.bf16.msra.mxu0 %v162
    %217 = vmatpush.bf16.msra.mxu0 %v161
    %218 = vmatmul.bf16.gmra.mxu0 %v205
    %v219 = vpop.f32.mrf.mxu0
    %v220 = vadd.f32 0.0, %v219
    %v221 = vpop.f32.mrf.mxu0
    %v222 = vadd.f32 0.0, %v221
    %223 = vmatmul.bf16.gmra.mxu0 %v208
    %v224 = vpop.f32.mrf.mxu0
    %v225 = vadd.f32 0.0, %v224
    %v226 = vpop.f32.mrf.mxu0
    %v227 = vadd.f32 0.0, %v226
    %228 = vdwg.mxu0
    %229 = vset.pattern.permute.xlu0 1
    %230 = vperm.xlu0 %229, %v52
    %v231 = vpop.permute.xlu0 %230
    %233 = vset.pattern.permute.xlu0 1
    %234 = vperm.xlu0 %233, %v53
    %v235 = vpop.permute.xlu0 %234
    %237 = vset.pattern.permute.xlu0 1
    %238 = vperm.xlu0 %237, %v54
    %v239 = vpop.permute.xlu0 %238
    %241 = vset.pattern.permute.xlu0 1
    %242 = vperm.xlu0 %241, %v55
    %v243 = vpop.permute.xlu0 %242
    %v245 = vmul.f32 %v220, %v231
    %v246 = vmul.f32 %v222, %v235
    %v247 = vmul.f32 %v225, %v239
    %v248 = vmul.f32 %v227, %v243
    %v249 = vpack.c.bf16 %v246, %v245
    %v250 = vpack.c.bf16 %v248, %v247
    %v251 = vld [vmem:[%s6] sm:$0xf]
    %v252 = vld [vmem:[%s6 + $0x4] sm:$0xf]
    %v253 = vld [vmem:[%s6 + $0x8] sm:$0xf]
    %v254 = vld [vmem:[%s6 + $0xc] sm:$0xf]
    %v259 = vunpack.c.l.b16 %v251
    %v260 = vunpack.c.l.b16 %v252
    %v261 = vunpack.c.l.b16 %v253
    %v262 = vunpack.c.l.b16 %v254
    %v263 = vpack.c.b16 %v260, %v259
    %v264 = vpack.c.b16 %v262, %v261
    %vm267 = vcmask 261120
    %v269 = vsel %vm267, %v249, 0
    %v272 = vsel %vm267, %v250, 0
    %274 = vmatpush.bf16.msra.mxu0 0
    %275 = vmatpush.bf16.msra.mxu0 0
    %276 = vmatpush.bf16.msra.mxu0 0
    %277 = vmatpush.bf16.msra.mxu0 0
    %278 = vmatpush.bf16.msra.mxu0 0
    %279 = vmatpush.bf16.msra.mxu0 0
    %280 = vmatpush.bf16.msra.mxu0 %v264
    %281 = vmatpush.bf16.msra.mxu0 %v263
    %282 = vmatmul.bf16.gmra.mxu0 %v269
    %v283 = vpop.f32.mrf.mxu0
    %v284 = vadd.f32 0.0, %v283
    %v285 = vpop.f32.mrf.mxu0
    %v286 = vadd.f32 0.0, %v285
    %287 = vmatmul.bf16.gmra.mxu0 %v272
    %v288 = vpop.f32.mrf.mxu0
    %v289 = vadd.f32 0.0, %v288
    %v290 = vpop.f32.mrf.mxu0
    %v291 = vadd.f32 0.0, %v290
    %292 = vdwg.mxu0
    %v293 = vmax.f32 %v284, 0.0
    %v294 = vmax.f32 %v286, 0.0
    %v295 = vmax.f32 %v289, 0.0
    %v296 = vmax.f32 %v291, 0.0
    %v297 = vpack.c.bf16 %v294, %v293
    %v298 = vpack.c.bf16 %v296, %v295
    %v299 = vld [vmem:[%s7] sm:$0xf]
    %v300 = vld [vmem:[%s7 + $0x4] sm:$0xf]
    %v301 = vld [vmem:[%s7 + $0x8] sm:$0xf]
    %v302 = vld [vmem:[%s7 + $0xc] sm:$0xf]
    %v303 = vld [vmem:[%s7 + $0x10] sm:$0xf]
    %v304 = vld [vmem:[%s7 + $0x14] sm:$0xf]
    %v305 = vld [vmem:[%s7 + $0x18] sm:$0xf]
    %v306 = vld [vmem:[%s7 + $0x1c] sm:$0xf]
    %v307 = vld [vmem:[%s7 + $0x20] sm:$0xf]
    %v308 = vld [vmem:[%s7 + $0x24] sm:$0xf]
    %v309 = vld [vmem:[%s7 + $0x28] sm:$0xf]
    %v310 = vld [vmem:[%s7 + $0x2c] sm:$0xf]
    %v311 = vld [vmem:[%s7 + $0x30] sm:$0xf]
    %v312 = vld [vmem:[%s7 + $0x34] sm:$0xf]
    %v313 = vld [vmem:[%s7 + $0x38] sm:$0xf]
    %v314 = vld [vmem:[%s7 + $0x3c] sm:$0xf]
    %v331 = vunpack.c.l.b16 %v299
    %v332 = vunpack.c.l.b16 %v300
    %v333 = vunpack.c.l.b16 %v301
    %v334 = vunpack.c.l.b16 %v302
    %v335 = vunpack.c.l.b16 %v303
    %v336 = vunpack.c.l.b16 %v304
    %v337 = vunpack.c.l.b16 %v305
    %v338 = vunpack.c.l.b16 %v306
    %v339 = vunpack.c.l.b16 %v307
    %v340 = vunpack.c.l.b16 %v308
    %v341 = vunpack.c.l.b16 %v309
    %v342 = vunpack.c.l.b16 %v310
    %v343 = vunpack.c.l.b16 %v311
    %v344 = vunpack.c.l.b16 %v312
    %v345 = vunpack.c.l.b16 %v313
    %v346 = vunpack.c.l.b16 %v314
    %v347 = vpack.c.b16 %v332, %v331
    %v348 = vpack.c.b16 %v334, %v333
    %v349 = vpack.c.b16 %v336, %v335
    %v350 = vpack.c.b16 %v338, %v337
    %v351 = vpack.c.b16 %v340, %v339
    %v352 = vpack.c.b16 %v342, %v341
    %v353 = vpack.c.b16 %v344, %v343
    %v354 = vpack.c.b16 %v346, %v345
    %363 = vmatpush.bf16.msra.mxu0 %v354
    %364 = vmatpush.bf16.msra.mxu0 %v353
    %365 = vmatpush.bf16.msra.mxu0 %v352
    %366 = vmatpush.bf16.msra.mxu0 %v351
    %367 = vmatpush.bf16.msra.mxu0 %v350
    %368 = vmatpush.bf16.msra.mxu0 %v349
    %369 = vmatpush.bf16.msra.mxu0 %v348
    %370 = vmatpush.bf16.msra.mxu0 %v347
    %371 = vmatmul.bf16.gmra.mxu0 %v297
    %v372 = vpop.f32.mrf.mxu0
    %v373 = vadd.f32 0.0, %v372
    %v374 = vpop.f32.mrf.mxu0
    %v375 = vadd.f32 0.0, %v374
    %376 = vmatmul.bf16.gmra.mxu0 %v298
    %v377 = vpop.f32.mrf.mxu0
    %v378 = vadd.f32 0.0, %v377
    %v379 = vpop.f32.mrf.mxu0
    %v380 = vadd.f32 0.0, %v379
    %381 = vdwg.mxu0
    %v382 = vsel %vm267, %v43, 0.0
    %v383 = vsel %vm267, %v44, 0.0
    %v384 = vadd.f32 %v382, %v383
    %385 = vadd.xlane.f32.xlu0 %v384
    %v386 = vpop.xlane.xlu0 %385
    %v387 = vrot.slane %v386, 4
    %v388 = vadd.f32 %v386, %v387
    %v389 = vrot.slane %v388, 2
    %v390 = vadd.f32 %v388, %v389
    %v391 = vrot.slane %v390, 1
    %v392 = vadd.f32 %v390, %v391
    %s393 = vtos %v392
    %p394 = scmp.gt.f32.partialorder %s393, 0.0
    %s395 = smax.f32 %s393, 1.0
    %v396 = vstv %s395
    %v397 = vrcp.pop %v396
    %v398 = vmul.f32 %v396, %v397
    %v399 = vsub.f32 1.0, %v398
    %v400 = vmul.f32 %v397, %v399
    %v401 = vadd.f32 %v397, %v400
    %vm402 = vweird.f32 %v396
    %vm403 = vweird.f32 %v397
    %vm404 = vmor %vm402, %vm403
    %v405 = vsel %vm404, %v397, %v401
    %v406 = vand.u32 2147483647, %v396
    %vm407 = vcmp.eq.f32.partialorder %v406, 8.507059e+37
    %v408 = vand.u32 %v396, 2147483648
    %v409 = vor.u32 1.1754944e-38, %v408
    %v410 = vsel %vm407, %v409, %v405
    %s411 = vtos %v410
    %s412 = scalar_select %p394, %s411, 0.0
    %v413 = vperm.slane %v50, 0
    %414 = vset.pattern.permute.xlu0 2
    %415 = vperm.xlu0 %414, %v52
    %v416 = vpop.permute.xlu0 %415
    %418 = vset.pattern.permute.xlu0 2
    %419 = vperm.xlu0 %418, %v53
    %v420 = vpop.permute.xlu0 %419
    %v422 = vadd.f32 %v413, %v416
    %v423 = vadd.f32 %v413, %v420
    %v424 = vmax.f32 %v422, 0.0
    %v425 = vmax.f32 %v423, 0.0
    %v426 = vadd.f32 %v424, 0.1
    %v427 = vadd.f32 %v425, 0.1
    %v428 = vmul.f32 %v43, %v426
    %v429 = vmul.f32 %v44, %v427
    %v430 = vpack.c.bf16 %v429, %v428
    %v431 = vstv %s412
    %v432 = vmul.f32 %v52, %v431
    %v433 = vmul.f32 %v53, %v431
    %v434 = vmul.f32 %v54, %v431
    %v435 = vmul.f32 %v55, %v431
    %437 = vset.pattern.permute.xlu0 5
    %438 = vperm.xlu0 %437, %v432
    %v439 = vpop.permute.xlu0 %438
    %442 = vset.pattern.permute.xlu0 5
    %443 = vperm.xlu0 %442, %v433
    %v444 = vpop.permute.xlu0 %443
    %447 = vset.pattern.permute.xlu0 5
    %448 = vperm.xlu0 %447, %v434
    %v449 = vpop.permute.xlu0 %448
    %452 = vset.pattern.permute.xlu0 5
    %453 = vperm.xlu0 %452, %v435
    %v454 = vpop.permute.xlu0 %453
    %v456 = vmul.f32 %v373, %v439
    %v457 = vmul.f32 %v375, %v444
    %v458 = vmul.f32 %v378, %v449
    %v459 = vmul.f32 %v380, %v454
    %v460 = vpack.c.bf16 %v457, %v456
    %v461 = vpack.c.bf16 %v459, %v458
    %v463 = vsel %vm267, %v430, 0
    %465 = vmatpush.bf16.msra.mxu0 0
    %466 = vmatpush.bf16.msra.mxu0 0
    %467 = vmatpush.bf16.msra.mxu0 0
    %468 = vmatpush.bf16.msra.mxu0 0
    %469 = vmatpush.bf16.msra.mxu0 0
    %470 = vmatpush.bf16.msra.mxu0 0
    %471 = vmatpush.bf16.msra.mxu0 %v461
    %472 = vmatpush.bf16.msra.mxu0 %v460
    %473 = vmatmul.bf16.gmra.mxu0 %v463
    %v474 = vpop.f32.mrf.mxu0
    %v475 = vadd.f32 0.0, %v474
    %v476 = vpop.f32.mrf.mxu0
    %v477 = vadd.f32 0.0, %v476
    %478 = vdwg.mxu0
    %479 = vset.pattern.permute.xlu0 3
    %480 = vperm.xlu0 %479, %v52
    %v481 = vpop.permute.xlu0 %480
    %483 = vset.pattern.permute.xlu0 3
    %484 = vperm.xlu0 %483, %v53
    %v485 = vpop.permute.xlu0 %484
    %v487 = vmul.f32 %v475, %v481
    %v488 = vmul.f32 %v477, %v485
    %v489 = vmax.f32 %v487, 0.0
    %v490 = vmax.f32 %v488, 0.0
    %491 = vst [vmem:[%s8] sm:$0xff] %v489
    %492 = vst [vmem:[%s8 + $0x8] sm:$0xff] %v490
    %v493 = vadd.f32 %v424, 1.0
    %v494 = vadd.f32 %v425, 1.0
    %v495 = vperm.slane %v51, 0
    %v496 = vmul.f32 %v493, %v495
    %v497 = vmul.f32 %v494, %v495
    %v498 = vmul.f32 %v496, 0.03125
    %v499 = vmul.f32 %v497, 0.03125
    %v500 = vmul.f32 %v47, %v498
    %v501 = vmul.f32 %v48, %v499
    %v502 = vsel %vm267, %v500, 0.0
    %v503 = vsel %vm267, %v501, 0.0
    %v504 = vadd.f32 %v502, %v503
    %v505 = vrot.slane %v504, 4
    %v506 = vadd.f32 %v504, %v505
    %v507 = vrot.slane %v506, 2
    %v508 = vadd.f32 %v506, %v507
    %v509 = vrot.slane %v508, 1
    %v510 = vadd.f32 %v508, %v509
    %v511 = vadd.f32 %v489, %v490
    %v512 = vrot.slane %v511, 4
    %v513 = vadd.f32 %v511, %v512
    %v514 = vrot.slane %v513, 2
    %v515 = vadd.f32 %v513, %v514
    %v516 = vrot.slane %v515, 1
    %v517 = vadd.f32 %v515, %v516
    %v518 = vmul.f32 %v517, 0.0625
    %v519 = vmul.f32 %v510, %v510
    %v520 = vmul.f32 %v373, %v373
    %v521 = vmul.f32 %v375, %v375
    %v522 = vmul.f32 %v378, %v378
    %v523 = vmul.f32 %v380, %v380
    %v525 = vsel %vm267, %v519, 0
    %527 = vmatpush.msra.mxu0 0.0
    %528 = vmatpush.msra.mxu0 0.0
    %529 = vmatpush.msra.mxu0 0.0
    %530 = vmatpush.msra.mxu0 0.0
    %531 = vmatpush.msra.mxu0 0.0
    %532 = vmatpush.msra.mxu0 0.0
    %533 = vmatpush.msra.mxu0 0.0
    %534 = vmatpush.msra.mxu0 0.0
    %535 = vmatpush.msra.mxu0 0.0
    %536 = vmatpush.msra.mxu0 0.0
    %537 = vmatpush.msra.mxu0 0.0
    %538 = vmatpush.msra.mxu0 0.0
    %539 = vmatpush.msra.mxu0 %v523
    %540 = vmatpush.msra.mxu0 %v522
    %541 = vmatpush.msra.mxu0 %v521
    %542 = vmatpush.msra.mxu0 %v520
    %543 = vmatmul.f32.gmra.mxu0 %v525
    %v544 = vpop.f32.mrf.mxu0
    %v545 = vadd.f32 0.0, %v544
    %546 = vdwg.mxu0
    %vm547 = vcmask 1040384
    %v548 = vsel %vm547, %v545, 0.0
    %549 = vadd.xlane.f32.xlu0 %v548
    %v550 = vpop.xlane.xlu0 %549
    %v551 = vrot.slane %v550, 4
    %v552 = vadd.f32 %v550, %v551
    %v553 = vrot.slane %v552, 2
    %v554 = vadd.f32 %v552, %v553
    %v555 = vrot.slane %v554, 1
    %v556 = vadd.f32 %v554, %v555
    %s557 = vtos %v556
    %v558 = vstv %s557
    %v560 = vsel %vm267, %v510, 0
    %562 = vmatpush.msra.mxu0 0.0
    %563 = vmatpush.msra.mxu0 0.0
    %564 = vmatpush.msra.mxu0 0.0
    %565 = vmatpush.msra.mxu0 0.0
    %566 = vmatpush.msra.mxu0 0.0
    %567 = vmatpush.msra.mxu0 0.0
    %568 = vmatpush.msra.mxu0 0.0
    %569 = vmatpush.msra.mxu0 0.0
    %570 = vmatpush.msra.mxu0 0.0
    %571 = vmatpush.msra.mxu0 0.0
    %572 = vmatpush.msra.mxu0 0.0
    %573 = vmatpush.msra.mxu0 0.0
    %574 = vmatpush.msra.mxu0 %v380
    %575 = vmatpush.msra.mxu0 %v378
    %576 = vmatpush.msra.mxu0 %v375
    %577 = vmatpush.msra.mxu0 %v373
    %578 = vmatmul.f32.gmra.mxu0 %v560
    %v579 = vpop.f32.mrf.mxu0
    %v580 = vadd.f32 0.0, %v579
    %581 = vdwg.mxu0
    %v582 = vmul.f32 %v518, %v580
    %v583 = vsel %vm547, %v582, 0.0
    %584 = vadd.xlane.f32.xlu0 %v583
    %v585 = vpop.xlane.xlu0 %584
    %v586 = vrot.slane %v585, 4
    %v587 = vadd.f32 %v585, %v586
    %v588 = vrot.slane %v587, 2
    %v589 = vadd.f32 %v587, %v588
    %v590 = vrot.slane %v589, 1
    %v591 = vadd.f32 %v589, %v590
    %s592 = vtos %v591
    %v593 = vstv %s592
    %v594 = vmul.f32 %v518, %v518
    %v595 = vsel %vm547, %v594, 0.0
    %596 = vadd.xlane.f32.xlu0 %v595
    %v597 = vpop.xlane.xlu0 %596
    %v598 = vrot.slane %v597, 4
    %v599 = vadd.f32 %v597, %v598
    %v600 = vrot.slane %v599, 2
    %v601 = vadd.f32 %v599, %v600
    %v602 = vrot.slane %v601, 1
    %v603 = vadd.f32 %v601, %v602
    %s604 = vtos %v603
    %v605 = vstv %s604
    %v606 = vmul.f32 %v605, 32.0
    %v607 = vmul.f32 %v593, 2.0
    %v608 = vsub.f32 %v558, %v607
    %v609 = vadd.f32 %v608, %v606
    %v610 = vmul.f32 %v609, 0.001953125
    %vm611 = vcmask 0
    %612 = vst.msk [vmem:[#allocation2] sm:$0x1] %vm611, %v610
    // Predicated region
    $region34: #{_adapt_sage_forward.1} parent=1 // pred_check
      _
    $region35: #{_adapt_sage_forward.1} parent=1 // pred_check_branch
      %614 = sbr.rel (0) target = $region37
    $region36: #{_adapt_sage_forward.1} parent=1 // pred_region
      _
    $region37: #{_adapt_sage_forward.1} parent=1 // pred_fallthru
      _
    // Predicated region
    $region38: #{_adapt_sage_forward.1} parent=1 // pred_check
      _
    $region39: #{_adapt_sage_forward.1} parent=1 // pred_check_branch
      %616 = sbr.rel (0) target = $region41
    $region40: #{_adapt_sage_forward.1} parent=1 // pred_region
      %618 = vsyncadd [#allocation3], 0
      %s620 = sshll.u32 [#allocation2], 4
      %s621 = int_to_ptr.vmem [resolvable:$true] %s620
      %s622 = sshll.u32 %s9, 4
      %s623 = int_to_ptr.hbm [resolvable:$true] %s622
      %625 = dma.vmem_to_hbm [thread:$0]  %s621, 16, %s623, [#allocation3]
    $region41: #{_adapt_sage_forward.1} parent=1 // pred_fallthru
      _
    // Predicated region
    $region42: #{_adapt_sage_forward.1} parent=1 // pred_check
      _
    $region43: #{_adapt_sage_forward.1} parent=1 // pred_check_branch
      %627 = sbr.rel (0) target = $region45
    $region44: #{_adapt_sage_forward.1} parent=1 // pred_region
      _
    $region45: #{_adapt_sage_forward.1} parent=1 // pred_fallthru
      _
    // Predicated region
    $region46: #{_adapt_sage_forward.1} parent=1 // pred_check
      _
    $region47: #{_adapt_sage_forward.1} parent=1 // pred_check_branch
      %629 = sbr.rel (0) target = $region49
    $region48: #{_adapt_sage_forward.1} parent=1 // pred_region
      %631 = dma.done [#allocation3], 16
    $region49: #{_adapt_sage_forward.1} parent=1 // pred_fallthru
      _
    %632 = vsyncpa [#allocation3], 1

</llo_original>
